<compile_context>
chip_gen: v5e
topology: v5e:2x2
jax: 0.10.0
libtpu: 0.0.40
codegen_flags: <defaults>
</compile_context>

<pallas_src>
import jax
import jax.numpy as jnp
from jax.experimental import pallas as pl
from jax.experimental.pallas import tpu as pltpu


# ---------------------------------------------------------------------------
# Pallas kernel: fused 2-layer MLP feature extractor + L2 normalization.
# x tile: [TB, D] bf16; W1: [D, H] bf16; W2: [H, F] bf16; biases f32.
# ---------------------------------------------------------------------------
def feature_kernel(x_ref, w1_ref, b1_ref, w2_ref, b2_ref, out_ref):
    x = x_ref[...]                                            # [TB, D] bf16
    # Layer 1: bf16 MXU matmul, f32 accumulate; bias + ReLU in f32 on the VPU.
    h = jnp.dot(x, w1_ref[...], preferred_element_type=jnp.float32)
    h = jnp.maximum(h + b1_ref[...], 0.0)                     # [TB, H] f32
    # Layer 2: feed MXU bf16 again, accumulate f32.
    f = jnp.dot(h.astype(jnp.bfloat16), w2_ref[...],
                preferred_element_type=jnp.float32)
    f = f + b2_ref[...]                                       # [TB, F] f32
    # L2 normalize along the feature axis (rsqrt -> EUP, sum -> XLU: free slots).
    inv_norm = jax.lax.rsqrt(jnp.sum(f * f, axis=-1, keepdims=True) + 1e-12)
    out_ref[...] = (f * inv_norm).astype(out_ref.dtype)


def _pick_batch_tile(b):
    """Batch tile: multiple of 16 (bf16 sublane packing), capped at 256 (MXU M),
    and split into >=2 tiles when the batch allows (v7x megacore)."""
    b16 = ((b + 15) // 16) * 16
    if b16 <= 16:
        return 16
    if b16 <= 512:
        half = ((b16 // 2 + 15) // 16) * 16    # >=2 parallel tiles
        return min(256, half)
    return 256


def _features_pallas(x_flat_bf16, w1_bf16, b1, w2_bf16, b2):
    """x_flat_bf16: [B, D] bf16.  Returns l2-normalized features [B, F] f32."""
    B, D = x_flat_bf16.shape
    H = w1_bf16.shape[1]
    F = w2_bf16.shape[1]

    TB = _pick_batch_tile(B)
    Bp = pl.cdiv(B, TB) * TB
    if Bp != B:
        # Cheap zero pad (no zeros+scatter pass); padded rows are finite through
        # ReLU + L2-normalize and are sliced off below.
        x_flat_bf16 = jnp.pad(x_flat_bf16, ((0, Bp - B), (0, 0)))

    grid_spec = pl.GridSpec(
        grid=(Bp // TB,),                        # batch tiles; weights resident
        in_specs=[
            pl.BlockSpec((TB, D), lambda i: (i, 0)),
            pl.BlockSpec((D, H), lambda i: (0, 0)),
            pl.BlockSpec((1, H), lambda i: (0, 0)),
            pl.BlockSpec((H, F), lambda i: (0, 0)),
            pl.BlockSpec((1, F), lambda i: (0, 0)),
        ],
        out_specs=pl.BlockSpec((TB, F), lambda i: (i, 0)),
    )

    out = pl.pallas_call(
        feature_kernel,
        out_shape=jax.ShapeDtypeStruct((Bp, F), jnp.float32),
        grid_spec=grid_spec,
        compiler_params=pltpu.CompilerParams(
            dimension_semantics=("parallel",),   # shard batch tiles across TCs (v7x)
        ),
    )(x_flat_bf16, w1_bf16, b1, w2_bf16, b2)

    return out[:B]


# Jitted end-to-end paths: flatten / cast / concat / pad / kernel / slice are
# dispatched as one compiled program.
@jax.jit
def _get_features_single(x_nchw, w1, b1, w2, b2):
    B = x_nchw.shape[0]
    x_flat = x_nchw.reshape(B, -1).astype(jnp.bfloat16)
    return _features_pallas(x_flat, w1, b1, w2, b2)


@jax.jit
def _get_features_pair(x1_nchw, x2_nchw, w1, b1, w2, b2):
    B = x1_nchw.shape[0]
    # Cast to bf16 BEFORE the concat: the fresh [2B, D] HBM buffer is half-size
    # and no intermediate f32 pass is materialized.
    x_flat = jnp.concatenate(
        [x1_nchw.reshape(B, -1).astype(jnp.bfloat16),
         x2_nchw.reshape(x2_nchw.shape[0], -1).astype(jnp.bfloat16)],
        axis=0)                                   # [2B, D] bf16: ONE kernel launch
    f = _features_pallas(x_flat, w1, b1, w2, b2)
    return f[:B], f[B:]


# ---------------------------------------------------------------------------
# Model wrapper (mirrors ContrastiveModel.forward semantics).
# ---------------------------------------------------------------------------
class ContrastiveModelPallas:
    """Contrastive wrapper: forward(x1) -> f1 ; forward(x1, x2) -> (f1, f2)."""

    def __init__(self, in_dim, hidden_dim, feat_dim, key):
        k1, k2, k3, k4 = jax.random.split(key, 4)
        # Deterministic synthetic parameters; weights stored bf16 (MXU operands),
        # biases f32 (epilogue stays in f32).
        self.w1 = (jax.random.normal(k1, (in_dim, hidden_dim), jnp.float32)
                   * (1.0 / jnp.sqrt(in_dim))).astype(jnp.bfloat16)
        self.b1 = jax.random.normal(k2, (1, hidden_dim), jnp.float32) * 0.01
        self.w2 = (jax.random.normal(k3, (hidden_dim, feat_dim), jnp.float32)
                   * (1.0 / jnp.sqrt(hidden_dim))).astype(jnp.bfloat16)
        self.b2 = jax.random.normal(k4, (1, feat_dim), jnp.float32) * 0.01

    def get_features(self, x_nchw):
        return _get_features_single(x_nchw, self.w1, self.b1, self.w2, self.b2)

    def forward(self, x1, x2=None):
        if x2 is None:
            return self.get_features(x1)
        # Both views processed in a single fused pallas_call.
        return _get_features_pair(x1, x2, self.w1, self.b1, self.w2, self.b2)


# ---------------------------------------------------------------------------
# Main: deterministic inputs, run once, verify against pure-JAX reference.
# ---------------------------------------------------------------------------
if __name__ == "__main__":
    key = jax.random.PRNGKey(0)
    kx1, kx2, kparams = jax.random.split(key, 3)

    B, C, Himg, Wimg = 2, 4, 16, 16          # small NCHW input
    D = C * Himg * Wimg                       # 1024 flattened
    HIDDEN, FEAT = 256, 128

    x1 = jax.random.normal(kx1, (B, C, Himg, Wimg), jnp.float32)
    x2 = jax.random.normal(kx2, (B, C, Himg, Wimg), jnp.float32)

    model = ContrastiveModelPallas(D, HIDDEN, FEAT, kparams)

    # Two-view contrastive forward (x1, x2) -> (f1, f2)   [single kernel launch]
    f1, f2 = model.forward(x1, x2)
    jax.block_until_ready(f1)
    jax.block_until_ready(f2)

    # Single-view forward x1 -> f1
    f1_only = model.forward(x1)
    jax.block_until_ready(f1_only)

    # Pure-JAX reference (same bf16-operand / f32-accumulate recipe).
    # NOTE: inputs are quantized to bf16 before the D=1024 contraction; 2e-2
    # tolerance documents the expected deviation vs a pure-f32 torch reference.
    def ref_features(x):
        xf = x.reshape(x.shape[0], -1).astype(jnp.bfloat16)
        h = jnp.maximum(
            jnp.dot(xf, model.w1, preferred_element_type=jnp.float32)
            + model.b1, 0.0)
        f = jnp.dot(h.astype(jnp.bfloat16), model.w2,
                    preferred_element_type=jnp.float32) + model.b2
        return f * jax.lax.rsqrt(jnp.sum(f * f, axis=-1, keepdims=True) + 1e-12)

    assert jnp.allclose(f1, ref_features(x1), atol=2e-2, rtol=2e-2)
    assert jnp.allclose(f2, ref_features(x2), atol=2e-2, rtol=2e-2)
    assert jnp.allclose(f1_only, f1, atol=1e-5, rtol=1e-5)
    assert f1.shape == (B, FEAT) and f2.shape == (B, FEAT)

    print("KERNEL_OK")
</pallas_src>

<mosaic_0001>
module attributes {stable_mosaic.version = 11 : i64} {
  func.func @feature_kernel(%arg0: i32, %arg1: memref<16x1024xbf16, #tpu.memory_space<vmem>>, %arg2: memref<1024x256xbf16, #tpu.memory_space<vmem>>, %arg3: memref<1x256xf32, #tpu.memory_space<vmem>>, %arg4: memref<256x128xbf16, #tpu.memory_space<vmem>>, %arg5: memref<1x128xf32, #tpu.memory_space<vmem>>, %arg6: memref<16x128xf32, #tpu.memory_space<vmem>>) attributes {dimension_semantics = [#tpu.dimension_semantics<parallel>], iteration_bounds = array<i64: 1>, scalar_prefetch = 0 : i64, scratch_operands = 0 : i64, tpu.core_type = #tpu.core_type<tc>, window_params = [{transform_indices = @transform_0, window_bounds = array<i64: 16, 1024>}, {pipeline_mode = #tpu.pipeline_mode<synchronous>, transform_indices = @transform_1, window_bounds = array<i64: 1024, 256>}, {pipeline_mode = #tpu.pipeline_mode<synchronous>, transform_indices = @transform_2, window_bounds = array<i64: 1, 256>}, {pipeline_mode = #tpu.pipeline_mode<synchronous>, transform_indices = @transform_3, window_bounds = array<i64: 256, 128>}, {pipeline_mode = #tpu.pipeline_mode<synchronous>, transform_indices = @transform_4, window_bounds = array<i64: 1, 128>}, {transform_indices = @transform_5, window_bounds = array<i64: 16, 128>}]} {
    %c0 = arith.constant 0 : index
    %c0_0 = arith.constant 0 : index
    %0 = vector.load %arg1[%c0, %c0_0] : memref<16x1024xbf16, #tpu.memory_space<vmem>>, vector<16x1024xbf16>
    %c0_1 = arith.constant 0 : index
    %c0_2 = arith.constant 0 : index
    %1 = vector.load %arg2[%c0_1, %c0_2] : memref<1024x256xbf16, #tpu.memory_space<vmem>>, vector<1024x256xbf16>
    %cst = arith.constant dense<0.000000e+00> : vector<16x256xf32>
    %2 = tpu.matmul %0, %1, %cst {dimension_numbers = #tpu.dot_dimension_numbers<[1], [0], [0], [1], [0, 0, 1, 1], [], []>} : vector<16x1024xbf16>, vector<1024x256xbf16>, vector<16x256xf32> -> vector<16x256xf32>
    %c0_3 = arith.constant 0 : index
    %c0_4 = arith.constant 0 : index
    %3 = vector.load %arg3[%c0_3, %c0_4] : memref<1x256xf32, #tpu.memory_space<vmem>>, vector<1x256xf32>
    %4 = vector.broadcast %3 : vector<1x256xf32> to vector<16x256xf32>
    %5 = arith.addf %2, %4 : vector<16x256xf32>
    %cst_5 = arith.constant 0.000000e+00 : f32
    %6 = vector.broadcast %cst_5 : f32 to vector<16x256xf32>
    %7 = arith.maximumf %5, %6 : vector<16x256xf32>
    %8 = arith.truncf %7 : vector<16x256xf32> to vector<16x256xbf16>
    %c0_6 = arith.constant 0 : index
    %c0_7 = arith.constant 0 : index
    %9 = vector.load %arg4[%c0_6, %c0_7] : memref<256x128xbf16, #tpu.memory_space<vmem>>, vector<256x128xbf16>
    %cst_8 = arith.constant dense<0.000000e+00> : vector<16x128xf32>
    %10 = tpu.matmul %8, %9, %cst_8 {dimension_numbers = #tpu.dot_dimension_numbers<[1], [0], [0], [1], [0, 0, 1, 1], [], []>} : vector<16x256xbf16>, vector<256x128xbf16>, vector<16x128xf32> -> vector<16x128xf32>
    %c0_9 = arith.constant 0 : index
    %c0_10 = arith.constant 0 : index
    %11 = vector.load %arg5[%c0_9, %c0_10] : memref<1x128xf32, #tpu.memory_space<vmem>>, vector<1x128xf32>
    %12 = vector.broadcast %11 : vector<1x128xf32> to vector<16x128xf32>
    %13 = arith.addf %10, %12 : vector<16x128xf32>
    %14 = arith.mulf %13, %13 : vector<16x128xf32>
    %cst_11 = arith.constant dense<0.000000e+00> : vector<16xf32>
    %15 = vector.multi_reduction <add>, %14, %cst_11 [1] : vector<16x128xf32> to vector<16xf32>
    %16 = vector.shape_cast %15 : vector<16xf32> to vector<16x1xf32>
    %cst_12 = arith.constant 9.99999996E-13 : f32
    %17 = vector.broadcast %cst_12 : f32 to vector<16x1xf32>
    %18 = arith.addf %16, %17 : vector<16x1xf32>
    %19 = math.rsqrt %18 : vector<16x1xf32>
    %20 = vector.broadcast %19 : vector<16x1xf32> to vector<16x128xf32>
    %21 = arith.mulf %13, %20 : vector<16x128xf32>
    %c0_13 = arith.constant 0 : index
    %c0_14 = arith.constant 0 : index
    %22 = vector.load %arg6[%c0_13, %c0_14] : memref<16x128xf32, #tpu.memory_space<vmem>>, vector<16x128xf32>
    tpu.vector_store %arg6[%c0_13, %c0_14], %21 {strides = array<i32>} : memref<16x128xf32, #tpu.memory_space<vmem>>, vector<16x128xf32>,
    return
  }
  func.func @transform_0(%arg0: i32) -> (i32, i32) {
    %c0_i32 = arith.constant 0 : i32
    %c0_i32_0 = arith.constant 0 : i32
    return %arg0, %c0_i32 : i32, i32
  }
  func.func @transform_1(%arg0: i32) -> (i32, i32) {
    %c0_i32 = arith.constant 0 : i32
    %c0_i32_0 = arith.constant 0 : i32
    %c0_i32_1 = arith.constant 0 : i32
    return %c0_i32, %c0_i32_0 : i32, i32
  }
  func.func @transform_2(%arg0: i32) -> (i32, i32) {
    %c0_i32 = arith.constant 0 : i32
    %c0_i32_0 = arith.constant 0 : i32
    %c0_i32_1 = arith.constant 0 : i32
    return %c0_i32, %c0_i32_0 : i32, i32
  }
  func.func @transform_3(%arg0: i32) -> (i32, i32) {
    %c0_i32 = arith.constant 0 : i32
    %c0_i32_0 = arith.constant 0 : i32
    %c0_i32_1 = arith.constant 0 : i32
    return %c0_i32, %c0_i32_0 : i32, i32
  }
  func.func @transform_4(%arg0: i32) -> (i32, i32) {
    %c0_i32 = arith.constant 0 : i32
    %c0_i32_0 = arith.constant 0 : i32
    %c0_i32_1 = arith.constant 0 : i32
    return %c0_i32, %c0_i32_0 : i32, i32
  }
  func.func @transform_5(%arg0: i32) -> (i32, i32) {
    %c0_i32 = arith.constant 0 : i32
    %c0_i32_0 = arith.constant 0 : i32
    return %arg0, %c0_i32 : i32, i32
  }
}

</mosaic_0001>

<llo_original>
// kernel: _get_features_pair.1
$region0: #{_get_features_pair.1}
  #allocation0 [shape = 'u32[]', space=smem, size = 0x4, offset = 0x4, fixed_abs, tag = 'smem constant byte address 0x4 - core index']
  #allocation1 [shape = 'u32[72,128]{1,0:T(1,128)}', space=vmem, size = 0x9000, scoped, tag = 'internal scratch']
  %s0 = inlined_call_operand.vmem [shape: bf16[16,1024], index: 0, kind: input, shape index: {}]
  %s1 = inlined_call_operand.hbm [shape: bf16[1024,256], index: 1, kind: input, shape index: {}]
  %s2 = inlined_call_operand.vmem [shape: f32[1,256], index: 2, kind: input, shape index: {}]
  %s3 = inlined_call_operand.vmem [shape: bf16[256,128], index: 3, kind: input, shape index: {}]
  %s4 = inlined_call_operand.vmem [shape: f32[1,128], index: 4, kind: input, shape index: {}]
  %s5 = inlined_call_operand.vmem [shape: f32[16,128], index: 5, kind: output, shape index: {}]
  %s6 = sld [smem:[#allocation0]]
  $region34: #{_get_features_pair.1} parent=0
    _
  %s8 = ssub.s32 1, %s6
  %s9 = scalar_select 0, %s8, %s6
  $region1: #{_get_features_pair.1} parent=0
    #allocation2 [shape = 'u8[524288]{0}', space=vmem, size = 0x80000, scoped, tag = 'input window, operand 1, single buffered']
    #allocation3 [shape = 's32[1]{0}', space=sflag, size = 0x4, scoped, tag = 'scoped memory for _get_features_pair.1']
    %10 = vsyncpa [#allocation3], 0
    // Predicated region
    $region2: #{_get_features_pair.1} parent=1 // pred_check
      _
    $region3: #{_get_features_pair.1} parent=1 // pred_check_branch
      %12 = sbr.rel (0) target = $region5
    $region4: #{_get_features_pair.1} parent=1 // pred_region
      _
    $region5: #{_get_features_pair.1} parent=1 // pred_fallthru
      _
    // Predicated region
    $region6: #{_get_features_pair.1} parent=1 // pred_check
      _
    $region7: #{_get_features_pair.1} parent=1 // pred_check_branch
      %14 = sbr.rel (0) target = $region9
    $region8: #{_get_features_pair.1} parent=1 // pred_region
      %16 = vsyncadd [#allocation3], 0
      %s17 = sshll.u32 %s1, 4
      %s18 = int_to_ptr.hbm [resolvable:$true] %s17
      %s19 = sshll.u32 [#allocation2], 4
      %s20 = int_to_ptr.vmem [resolvable:$true] %s19
      %25 = dma.hbm_to_vmem [thread:$0]  %s18, 16384, %s20, [#allocation3], 128, 128, 8
    $region9: #{_get_features_pair.1} parent=1 // pred_fallthru
      _
    // Predicated region
    $region10: #{_get_features_pair.1} parent=1 // pred_check
      _
    $region11: #{_get_features_pair.1} parent=1 // pred_check_branch
      %27 = sbr.rel (0) target = $region13
    $region12: #{_get_features_pair.1} parent=1 // pred_region
      _
    $region13: #{_get_features_pair.1} parent=1 // pred_fallthru
      _
    // Predicated region
    $region14: #{_get_features_pair.1} parent=1 // pred_check
      _
    $region15: #{_get_features_pair.1} parent=1 // pred_check_branch
      %29 = sbr.rel (0) target = $region17
    $region16: #{_get_features_pair.1} parent=1 // pred_region
      _
    $region17: #{_get_features_pair.1} parent=1 // pred_fallthru
      _
    // Predicated region
    $region18: #{_get_features_pair.1} parent=1 // pred_check
      _
    $region19: #{_get_features_pair.1} parent=1 // pred_check_branch
      %31 = sbr.rel (0) target = $region21
    $region20: #{_get_features_pair.1} parent=1 // pred_region
      _
    $region21: #{_get_features_pair.1} parent=1 // pred_fallthru
      _
    // Predicated region
    $region22: #{_get_features_pair.1} parent=1 // pred_check
      _
    $region23: #{_get_features_pair.1} parent=1 // pred_check_branch
      %33 = sbr.rel (0) target = $region25
    $region24: #{_get_features_pair.1} parent=1 // pred_region
      %35 = dma.done [#allocation3], 16384
    $region25: #{_get_features_pair.1} parent=1 // pred_fallthru
      _
    %v36 = vld [vmem:[%s0] sm:$0xff]
    %v37 = vld [vmem:[%s0 + $0x8] sm:$0xff]
    %v38 = vld [vmem:[%s0 + $0x10] sm:$0xff]
    %v39 = vld [vmem:[%s0 + $0x18] sm:$0xff]
    %v40 = vld [vmem:[%s0 + $0x20] sm:$0xff]
    %v41 = vld [vmem:[%s0 + $0x28] sm:$0xff]
    %v42 = vld [vmem:[%s0 + $0x30] sm:$0xff]
    %v43 = vld [vmem:[%s0 + $0x38] sm:$0xff]
    %v44 = vld [vmem:[#allocation2] sm:$0xff]
    %v45 = vld [vmem:[#allocation2 + $0x8] sm:$0xff]
    %v46 = vld [vmem:[#allocation2 + $0x10] sm:$0xff]
    %v47 = vld [vmem:[#allocation2 + $0x18] sm:$0xff]
    %v48 = vld [vmem:[#allocation2 + $0x20] sm:$0xff]
    %v49 = vld [vmem:[#allocation2 + $0x28] sm:$0xff]
    %v50 = vld [vmem:[#allocation2 + $0x30] sm:$0xff]
    %v51 = vld [vmem:[#allocation2 + $0x38] sm:$0xff]
    %v52 = vld [vmem:[#allocation2 + $0x40] sm:$0xff]
    %v53 = vld [vmem:[#allocation2 + $0x48] sm:$0xff]
    %v54 = vld [vmem:[#allocation2 + $0x50] sm:$0xff]
    %v55 = vld [vmem:[#allocation2 + $0x58] sm:$0xff]
    %v56 = vld [vmem:[#allocation2 + $0x60] sm:$0xff]
    %v57 = vld [vmem:[#allocation2 + $0x68] sm:$0xff]
    %v58 = vld [vmem:[#allocation2 + $0x70] sm:$0xff]
    %v59 = vld [vmem:[#allocation2 + $0x78] sm:$0xff]
    %v60 = vld [vmem:[#allocation2 + $0x80] sm:$0xff]
    %v61 = vld [vmem:[#allocation2 + $0x88] sm:$0xff]
    %v62 = vld [vmem:[#allocation2 + $0x90] sm:$0xff]
    %v63 = vld [vmem:[#allocation2 + $0x98] sm:$0xff]
    %v64 = vld [vmem:[#allocation2 + $0xa0] sm:$0xff]
    %v65 = vld [vmem:[#allocation2 + $0xa8] sm:$0xff]
    %v66 = vld [vmem:[#allocation2 + $0xb0] sm:$0xff]
    %v67 = vld [vmem:[#allocation2 + $0xb8] sm:$0xff]
    %v68 = vld [vmem:[#allocation2 + $0xc0] sm:$0xff]
    %v69 = vld [vmem:[#allocation2 + $0xc8] sm:$0xff]
    %v70 = vld [vmem:[#allocation2 + $0xd0] sm:$0xff]
    %v71 = vld [vmem:[#allocation2 + $0xd8] sm:$0xff]
    %v72 = vld [vmem:[#allocation2 + $0xe0] sm:$0xff]
    %v73 = vld [vmem:[#allocation2 + $0xe8] sm:$0xff]
    %v74 = vld [vmem:[#allocation2 + $0xf0] sm:$0xff]
    %v75 = vld [vmem:[#allocation2 + $0xf8] sm:$0xff]
    %v76 = vld [vmem:[#allocation2 + $0x100] sm:$0xff]
    %v77 = vld [vmem:[#allocation2 + $0x108] sm:$0xff]
    %v78 = vld [vmem:[#allocation2 + $0x110] sm:$0xff]
    %v79 = vld [vmem:[#allocation2 + $0x118] sm:$0xff]
    %v80 = vld [vmem:[#allocation2 + $0x120] sm:$0xff]
    %v81 = vld [vmem:[#allocation2 + $0x128] sm:$0xff]
    %v82 = vld [vmem:[#allocation2 + $0x130] sm:$0xff]
    %v83 = vld [vmem:[#allocation2 + $0x138] sm:$0xff]
    %v84 = vld [vmem:[#allocation2 + $0x140] sm:$0xff]
    %v85 = vld [vmem:[#allocation2 + $0x148] sm:$0xff]
    %v86 = vld [vmem:[#allocation2 + $0x150] sm:$0xff]
    %v87 = vld [vmem:[#allocation2 + $0x158] sm:$0xff]
    %v88 = vld [vmem:[#allocation2 + $0x160] sm:$0xff]
    %v89 = vld [vmem:[#allocation2 + $0x168] sm:$0xff]
    %v90 = vld [vmem:[#allocation2 + $0x170] sm:$0xff]
    %v91 = vld [vmem:[#allocation2 + $0x178] sm:$0xff]
    %v92 = vld [vmem:[#allocation2 + $0x180] sm:$0xff]
    %v93 = vld [vmem:[#allocation2 + $0x188] sm:$0xff]
    %v94 = vld [vmem:[#allocation2 + $0x190] sm:$0xff]
    %v95 = vld [vmem:[#allocation2 + $0x198] sm:$0xff]
    %v96 = vld [vmem:[#allocation2 + $0x1a0] sm:$0xff]
    %v97 = vld [vmem:[#allocation2 + $0x1a8] sm:$0xff]
    %v98 = vld [vmem:[#allocation2 + $0x1b0] sm:$0xff]
    %v99 = vld [vmem:[#allocation2 + $0x1b8] sm:$0xff]
    %v100 = vld [vmem:[#allocation2 + $0x1c0] sm:$0xff]
    %v101 = vld [vmem:[#allocation2 + $0x1c8] sm:$0xff]
    %v102 = vld [vmem:[#allocation2 + $0x1d0] sm:$0xff]
    %v103 = vld [vmem:[#allocation2 + $0x1d8] sm:$0xff]
    %v104 = vld [vmem:[#allocation2 + $0x1e0] sm:$0xff]
    %v105 = vld [vmem:[#allocation2 + $0x1e8] sm:$0xff]
    %v106 = vld [vmem:[#allocation2 + $0x1f0] sm:$0xff]
    %v107 = vld [vmem:[#allocation2 + $0x1f8] sm:$0xff]
    %v108 = vld [vmem:[#allocation2 + $0x200] sm:$0xff]
    %v109 = vld [vmem:[#allocation2 + $0x208] sm:$0xff]
    %v110 = vld [vmem:[#allocation2 + $0x210] sm:$0xff]
    %v111 = vld [vmem:[#allocation2 + $0x218] sm:$0xff]
    %v112 = vld [vmem:[#allocation2 + $0x220] sm:$0xff]
    %v113 = vld [vmem:[#allocation2 + $0x228] sm:$0xff]
    %v114 = vld [vmem:[#allocation2 + $0x230] sm:$0xff]
    %v115 = vld [vmem:[#allocation2 + $0x238] sm:$0xff]
    %v116 = vld [vmem:[#allocation2 + $0x240] sm:$0xff]
    %v117 = vld [vmem:[#allocation2 + $0x248] sm:$0xff]
    %v118 = vld [vmem:[#allocation2 + $0x250] sm:$0xff]
    %v119 = vld [vmem:[#allocation2 + $0x258] sm:$0xff]
    %v120 = vld [vmem:[#allocation2 + $0x260] sm:$0xff]
    %v121 = vld [vmem:[#allocation2 + $0x268] sm:$0xff]
    %v122 = vld [vmem:[#allocation2 + $0x270] sm:$0xff]
    %v123 = vld [vmem:[#allocation2 + $0x278] sm:$0xff]
    %v124 = vld [vmem:[#allocation2 + $0x280] sm:$0xff]
    %v125 = vld [vmem:[#allocation2 + $0x288] sm:$0xff]
    %v126 = vld [vmem:[#allocation2 + $0x290] sm:$0xff]
    %v127 = vld [vmem:[#allocation2 + $0x298] sm:$0xff]
    %v128 = vld [vmem:[#allocation2 + $0x2a0] sm:$0xff]
    %v129 = vld [vmem:[#allocation2 + $0x2a8] sm:$0xff]
    %v130 = vld [vmem:[#allocation2 + $0x2b0] sm:$0xff]
    %v131 = vld [vmem:[#allocation2 + $0x2b8] sm:$0xff]
    %v132 = vld [vmem:[#allocation2 + $0x2c0] sm:$0xff]
    %v133 = vld [vmem:[#allocation2 + $0x2c8] sm:$0xff]
    %v134 = vld [vmem:[#allocation2 + $0x2d0] sm:$0xff]
    %v135 = vld [vmem:[#allocation2 + $0x2d8] sm:$0xff]
    %v136 = vld [vmem:[#allocation2 + $0x2e0] sm:$0xff]
    %v137 = vld [vmem:[#allocation2 + $0x2e8] sm:$0xff]
    %v138 = vld [vmem:[#allocation2 + $0x2f0] sm:$0xff]
    %v139 = vld [vmem:[#allocation2 + $0x2f8] sm:$0xff]
    %v140 = vld [vmem:[#allocation2 + $0x300] sm:$0xff]
    %v141 = vld [vmem:[#allocation2 + $0x308] sm:$0xff]
    %v142 = vld [vmem:[#allocation2 + $0x310] sm:$0xff]
    %v143 = vld [vmem:[#allocation2 + $0x318] sm:$0xff]
    %v144 = vld [vmem:[#allocation2 + $0x320] sm:$0xff]
    %v145 = vld [vmem:[#allocation2 + $0x328] sm:$0xff]
    %v146 = vld [vmem:[#allocation2 + $0x330] sm:$0xff]
    %v147 = vld [vmem:[#allocation2 + $0x338] sm:$0xff]
    %v148 = vld [vmem:[#allocation2 + $0x340] sm:$0xff]
    %v149 = vld [vmem:[#allocation2 + $0x348] sm:$0xff]
    %v150 = vld [vmem:[#allocation2 + $0x350] sm:$0xff]
    %v151 = vld [vmem:[#allocation2 + $0x358] sm:$0xff]
    %v152 = vld [vmem:[#allocation2 + $0x360] sm:$0xff]
    %v153 = vld [vmem:[#allocation2 + $0x368] sm:$0xff]
    %v154 = vld [vmem:[#allocation2 + $0x370] sm:$0xff]
    %v155 = vld [vmem:[#allocation2 + $0x378] sm:$0xff]
    %v156 = vld [vmem:[#allocation2 + $0x380] sm:$0xff]
    %v157 = vld [vmem:[#allocation2 + $0x388] sm:$0xff]
    %v158 = vld [vmem:[#allocation2 + $0x390] sm:$0xff]
    %v159 = vld [vmem:[#allocation2 + $0x398] sm:$0xff]
    %v160 = vld [vmem:[#allocation2 + $0x3a0] sm:$0xff]
    %v161 = vld [vmem:[#allocation2 + $0x3a8] sm:$0xff]
    %v162 = vld [vmem:[#allocation2 + $0x3b0] sm:$0xff]
    %v163 = vld [vmem:[#allocation2 + $0x3b8] sm:$0xff]
    %v164 = vld [vmem:[#allocation2 + $0x3c0] sm:$0xff]
    %v165 = vld [vmem:[#allocation2 + $0x3c8] sm:$0xff]
    %v166 = vld [vmem:[#allocation2 + $0x3d0] sm:$0xff]
    %v167 = vld [vmem:[#allocation2 + $0x3d8] sm:$0xff]
    %v168 = vld [vmem:[#allocation2 + $0x3e0] sm:$0xff]
    %v169 = vld [vmem:[#allocation2 + $0x3e8] sm:$0xff]
    %v170 = vld [vmem:[#allocation2 + $0x3f0] sm:$0xff]
    %v171 = vld [vmem:[#allocation2 + $0x3f8] sm:$0xff]
    %v172 = vld [vmem:[%s2] sm:$0x3]
    %v174 = vperm.slane %v172, 0
    %v175 = vperm.slane %v172, 1
    %v186 = vunpack.c.l.b16 %v36
    %v187 = vunpack.c.h.b16 %v36
    %v188 = vunpack.c.l.b16 %v37
    %v189 = vunpack.c.h.b16 %v37
    %v190 = vunpack.c.l.b16 %v38
    %v191 = vunpack.c.h.b16 %v38
    %v192 = vunpack.c.l.b16 %v39
    %v193 = vunpack.c.h.b16 %v39
    %v194 = vunpack.c.l.b16 %v40
    %v195 = vunpack.c.h.b16 %v40
    %v196 = vunpack.c.l.b16 %v41
    %v197 = vunpack.c.h.b16 %v41
    %v198 = vunpack.c.l.b16 %v42
    %v199 = vunpack.c.h.b16 %v42
    %v200 = vunpack.c.l.b16 %v43
    %v201 = vunpack.c.h.b16 %v43
    %v202 = vpack.c.b16 %v194, %v186
    %v203 = vpack.c.b16 %v195, %v187
    %v204 = vpack.c.b16 %v196, %v188
    %v205 = vpack.c.b16 %v197, %v189
    %v206 = vpack.c.b16 %v198, %v190
    %v207 = vpack.c.b16 %v199, %v191
    %v208 = vpack.c.b16 %v200, %v192
    %v209 = vpack.c.b16 %v201, %v193
    %v346 = vunpack.c.l.b16 %v44
    %v347 = vunpack.c.h.b16 %v44
    %v348 = vunpack.c.l.b16 %v45
    %v349 = vunpack.c.h.b16 %v45
    %v350 = vunpack.c.l.b16 %v46
    %v351 = vunpack.c.h.b16 %v46
    %v352 = vunpack.c.l.b16 %v47
    %v353 = vunpack.c.h.b16 %v47
    %v354 = vunpack.c.l.b16 %v48
    %v355 = vunpack.c.h.b16 %v48
    %v356 = vunpack.c.l.b16 %v49
    %v357 = vunpack.c.h.b16 %v49
    %v358 = vunpack.c.l.b16 %v50
    %v359 = vunpack.c.h.b16 %v50
    %v360 = vunpack.c.l.b16 %v51
    %v361 = vunpack.c.h.b16 %v51
    %v362 = vunpack.c.l.b16 %v52
    %v363 = vunpack.c.h.b16 %v52
    %v364 = vunpack.c.l.b16 %v53
    %v365 = vunpack.c.h.b16 %v53
    %v366 = vunpack.c.l.b16 %v54
    %v367 = vunpack.c.h.b16 %v54
    %v368 = vunpack.c.l.b16 %v55
    %v369 = vunpack.c.h.b16 %v55
    %v370 = vunpack.c.l.b16 %v56
    %v371 = vunpack.c.h.b16 %v56
    %v372 = vunpack.c.l.b16 %v57
    %v373 = vunpack.c.h.b16 %v57
    %v374 = vunpack.c.l.b16 %v58
    %v375 = vunpack.c.h.b16 %v58
    %v376 = vunpack.c.l.b16 %v59
    %v377 = vunpack.c.h.b16 %v59
    %v378 = vunpack.c.l.b16 %v60
    %v379 = vunpack.c.h.b16 %v60
    %v380 = vunpack.c.l.b16 %v61
    %v381 = vunpack.c.h.b16 %v61
    %v382 = vunpack.c.l.b16 %v62
    %v383 = vunpack.c.h.b16 %v62
    %v384 = vunpack.c.l.b16 %v63
    %v385 = vunpack.c.h.b16 %v63
    %v386 = vunpack.c.l.b16 %v64
    %v387 = vunpack.c.h.b16 %v64
    %v388 = vunpack.c.l.b16 %v65
    %v389 = vunpack.c.h.b16 %v65
    %v390 = vunpack.c.l.b16 %v66
    %v391 = vunpack.c.h.b16 %v66
    %v392 = vunpack.c.l.b16 %v67
    %v393 = vunpack.c.h.b16 %v67
    %v394 = vunpack.c.l.b16 %v68
    %v395 = vunpack.c.h.b16 %v68
    %v396 = vunpack.c.l.b16 %v69
    %v397 = vunpack.c.h.b16 %v69
    %v398 = vunpack.c.l.b16 %v70
    %v399 = vunpack.c.h.b16 %v70
    %v400 = vunpack.c.l.b16 %v71
    %v401 = vunpack.c.h.b16 %v71
    %v402 = vunpack.c.l.b16 %v72
    %v403 = vunpack.c.h.b16 %v72
    %v404 = vunpack.c.l.b16 %v73
    %v405 = vunpack.c.h.b16 %v73
    %v406 = vunpack.c.l.b16 %v74
    %v407 = vunpack.c.h.b16 %v74
    %v408 = vunpack.c.l.b16 %v75
    %v409 = vunpack.c.h.b16 %v75
    %v410 = vunpack.c.l.b16 %v76
    %v411 = vunpack.c.h.b16 %v76
    %v412 = vunpack.c.l.b16 %v77
    %v413 = vunpack.c.h.b16 %v77
    %v414 = vunpack.c.l.b16 %v78
    %v415 = vunpack.c.h.b16 %v78
    %v416 = vunpack.c.l.b16 %v79
    %v417 = vunpack.c.h.b16 %v79
    %v418 = vunpack.c.l.b16 %v80
    %v419 = vunpack.c.h.b16 %v80
    %v420 = vunpack.c.l.b16 %v81
    %v421 = vunpack.c.h.b16 %v81
    %v422 = vunpack.c.l.b16 %v82
    %v423 = vunpack.c.h.b16 %v82
    %v424 = vunpack.c.l.b16 %v83
    %v425 = vunpack.c.h.b16 %v83
    %v426 = vunpack.c.l.b16 %v84
    %v427 = vunpack.c.h.b16 %v84
    %v428 = vunpack.c.l.b16 %v85
    %v429 = vunpack.c.h.b16 %v85
    %v430 = vunpack.c.l.b16 %v86
    %v431 = vunpack.c.h.b16 %v86
    %v432 = vunpack.c.l.b16 %v87
    %v433 = vunpack.c.h.b16 %v87
    %v434 = vunpack.c.l.b16 %v88
    %v435 = vunpack.c.h.b16 %v88
    %v436 = vunpack.c.l.b16 %v89
    %v437 = vunpack.c.h.b16 %v89
    %v438 = vunpack.c.l.b16 %v90
    %v439 = vunpack.c.h.b16 %v90
    %v440 = vunpack.c.l.b16 %v91
    %v441 = vunpack.c.h.b16 %v91
    %v442 = vunpack.c.l.b16 %v92
    %v443 = vunpack.c.h.b16 %v92
    %v444 = vunpack.c.l.b16 %v93
    %v445 = vunpack.c.h.b16 %v93
    %v446 = vunpack.c.l.b16 %v94
    %v447 = vunpack.c.h.b16 %v94
    %v448 = vunpack.c.l.b16 %v95
    %v449 = vunpack.c.h.b16 %v95
    %v450 = vunpack.c.l.b16 %v96
    %v451 = vunpack.c.h.b16 %v96
    %v452 = vunpack.c.l.b16 %v97
    %v453 = vunpack.c.h.b16 %v97
    %v454 = vunpack.c.l.b16 %v98
    %v455 = vunpack.c.h.b16 %v98
    %v456 = vunpack.c.l.b16 %v99
    %v457 = vunpack.c.h.b16 %v99
    %v458 = vunpack.c.l.b16 %v100
    %v459 = vunpack.c.h.b16 %v100
    %v460 = vunpack.c.l.b16 %v101
    %v461 = vunpack.c.h.b16 %v101
    %v462 = vunpack.c.l.b16 %v102
    %v463 = vunpack.c.h.b16 %v102
    %v464 = vunpack.c.l.b16 %v103
    %v465 = vunpack.c.h.b16 %v103
    %v466 = vunpack.c.l.b16 %v104
    %v467 = vunpack.c.h.b16 %v104
    %v468 = vunpack.c.l.b16 %v105
    %v469 = vunpack.c.h.b16 %v105
    %v470 = vunpack.c.l.b16 %v106
    %v471 = vunpack.c.h.b16 %v106
    %v472 = vunpack.c.l.b16 %v107
    %v473 = vunpack.c.h.b16 %v107
    %v474 = vunpack.c.l.b16 %v108
    %v475 = vunpack.c.h.b16 %v108
    %v476 = vunpack.c.l.b16 %v109
    %v477 = vunpack.c.h.b16 %v109
    %v478 = vunpack.c.l.b16 %v110
    %v479 = vunpack.c.h.b16 %v110
    %v480 = vunpack.c.l.b16 %v111
    %v481 = vunpack.c.h.b16 %v111
    %v482 = vunpack.c.l.b16 %v112
    %v483 = vunpack.c.h.b16 %v112
    %v484 = vunpack.c.l.b16 %v113
    %v485 = vunpack.c.h.b16 %v113
    %v486 = vunpack.c.l.b16 %v114
    %v487 = vunpack.c.h.b16 %v114
    %v488 = vunpack.c.l.b16 %v115
    %v489 = vunpack.c.h.b16 %v115
    %v490 = vunpack.c.l.b16 %v116
    %v491 = vunpack.c.h.b16 %v116
    %v492 = vunpack.c.l.b16 %v117
    %v493 = vunpack.c.h.b16 %v117
    %v494 = vunpack.c.l.b16 %v118
    %v495 = vunpack.c.h.b16 %v118
    %v496 = vunpack.c.l.b16 %v119
    %v497 = vunpack.c.h.b16 %v119
    %v498 = vunpack.c.l.b16 %v120
    %v499 = vunpack.c.h.b16 %v120
    %v500 = vunpack.c.l.b16 %v121
    %v501 = vunpack.c.h.b16 %v121
    %v502 = vunpack.c.l.b16 %v122
    %v503 = vunpack.c.h.b16 %v122
    %v504 = vunpack.c.l.b16 %v123
    %v505 = vunpack.c.h.b16 %v123
    %v506 = vunpack.c.l.b16 %v124
    %v507 = vunpack.c.h.b16 %v124
    %v508 = vunpack.c.l.b16 %v125
    %v509 = vunpack.c.h.b16 %v125
    %v510 = vunpack.c.l.b16 %v126
    %v511 = vunpack.c.h.b16 %v126
    %v512 = vunpack.c.l.b16 %v127
    %v513 = vunpack.c.h.b16 %v127
    %v514 = vunpack.c.l.b16 %v128
    %v515 = vunpack.c.h.b16 %v128
    %v516 = vunpack.c.l.b16 %v129
    %v517 = vunpack.c.h.b16 %v129
    %v518 = vunpack.c.l.b16 %v130
    %v519 = vunpack.c.h.b16 %v130
    %v520 = vunpack.c.l.b16 %v131
    %v521 = vunpack.c.h.b16 %v131
    %v522 = vunpack.c.l.b16 %v132
    %v523 = vunpack.c.h.b16 %v132
    %v524 = vunpack.c.l.b16 %v133
    %v525 = vunpack.c.h.b16 %v133
    %v526 = vunpack.c.l.b16 %v134
    %v527 = vunpack.c.h.b16 %v134
    %v528 = vunpack.c.l.b16 %v135
    %v529 = vunpack.c.h.b16 %v135
    %v530 = vunpack.c.l.b16 %v136
    %v531 = vunpack.c.h.b16 %v136
    %v532 = vunpack.c.l.b16 %v137
    %v533 = vunpack.c.h.b16 %v137
    %v534 = vunpack.c.l.b16 %v138
    %v535 = vunpack.c.h.b16 %v138
    %v536 = vunpack.c.l.b16 %v139
    %v537 = vunpack.c.h.b16 %v139
    %v538 = vunpack.c.l.b16 %v140
    %v539 = vunpack.c.h.b16 %v140
    %v540 = vunpack.c.l.b16 %v141
    %v541 = vunpack.c.h.b16 %v141
    %v542 = vunpack.c.l.b16 %v142
    %v543 = vunpack.c.h.b16 %v142
    %v544 = vunpack.c.l.b16 %v143
    %v545 = vunpack.c.h.b16 %v143
    %v546 = vunpack.c.l.b16 %v144
    %v547 = vunpack.c.h.b16 %v144
    %v548 = vunpack.c.l.b16 %v145
    %v549 = vunpack.c.h.b16 %v145
    %v550 = vunpack.c.l.b16 %v146
    %v551 = vunpack.c.h.b16 %v146
    %v552 = vunpack.c.l.b16 %v147
    %v553 = vunpack.c.h.b16 %v147
    %v554 = vunpack.c.l.b16 %v148
    %v555 = vunpack.c.h.b16 %v148
    %v556 = vunpack.c.l.b16 %v149
    %v557 = vunpack.c.h.b16 %v149
    %v558 = vunpack.c.l.b16 %v150
    %v559 = vunpack.c.h.b16 %v150
    %v560 = vunpack.c.l.b16 %v151
    %v561 = vunpack.c.h.b16 %v151
    %v562 = vunpack.c.l.b16 %v152
    %v563 = vunpack.c.h.b16 %v152
    %v564 = vunpack.c.l.b16 %v153
    %v565 = vunpack.c.h.b16 %v153
    %v566 = vunpack.c.l.b16 %v154
    %v567 = vunpack.c.h.b16 %v154
    %v568 = vunpack.c.l.b16 %v155
    %v569 = vunpack.c.h.b16 %v155
    %v570 = vunpack.c.l.b16 %v156
    %v571 = vunpack.c.h.b16 %v156
    %v572 = vunpack.c.l.b16 %v157
    %v573 = vunpack.c.h.b16 %v157
    %v574 = vunpack.c.l.b16 %v158
    %v575 = vunpack.c.h.b16 %v158
    %v576 = vunpack.c.l.b16 %v159
    %v577 = vunpack.c.h.b16 %v159
    %v578 = vunpack.c.l.b16 %v160
    %v579 = vunpack.c.h.b16 %v160
    %v580 = vunpack.c.l.b16 %v161
    %v581 = vunpack.c.h.b16 %v161
    %v582 = vunpack.c.l.b16 %v162
    %v583 = vunpack.c.h.b16 %v162
    %v584 = vunpack.c.l.b16 %v163
    %v585 = vunpack.c.h.b16 %v163
    %v586 = vunpack.c.l.b16 %v164
    %v587 = vunpack.c.h.b16 %v164
    %v588 = vunpack.c.l.b16 %v165
    %v589 = vunpack.c.h.b16 %v165
    %v590 = vunpack.c.l.b16 %v166
    %v591 = vunpack.c.h.b16 %v166
    %v592 = vunpack.c.l.b16 %v167
    %v593 = vunpack.c.h.b16 %v167
    %v594 = vunpack.c.l.b16 %v168
    %v595 = vunpack.c.h.b16 %v168
    %v596 = vunpack.c.l.b16 %v169
    %v597 = vunpack.c.h.b16 %v169
    %v598 = vunpack.c.l.b16 %v170
    %v599 = vunpack.c.h.b16 %v170
    %v600 = vunpack.c.l.b16 %v171
    %v601 = vunpack.c.h.b16 %v171
    %v602 = vpack.c.b16 %v348, %v346
    %v603 = vpack.c.b16 %v349, %v347
    %v604 = vpack.c.b16 %v352, %v350
    %v605 = vpack.c.b16 %v353, %v351
    %v606 = vpack.c.b16 %v356, %v354
    %v607 = vpack.c.b16 %v357, %v355
    %v608 = vpack.c.b16 %v360, %v358
    %v609 = vpack.c.b16 %v361, %v359
    %v610 = vpack.c.b16 %v364, %v362
    %v611 = vpack.c.b16 %v365, %v363
    %v612 = vpack.c.b16 %v368, %v366
    %v613 = vpack.c.b16 %v369, %v367
    %v614 = vpack.c.b16 %v372, %v370
    %v615 = vpack.c.b16 %v373, %v371
    %v616 = vpack.c.b16 %v376, %v374
    %v617 = vpack.c.b16 %v377, %v375
    %v618 = vpack.c.b16 %v380, %v378
    %v619 = vpack.c.b16 %v381, %v379
    %v620 = vpack.c.b16 %v384, %v382
    %v621 = vpack.c.b16 %v385, %v383
    %v622 = vpack.c.b16 %v388, %v386
    %v623 = vpack.c.b16 %v389, %v387
    %v624 = vpack.c.b16 %v392, %v390
    %v625 = vpack.c.b16 %v393, %v391
    %v626 = vpack.c.b16 %v396, %v394
    %v627 = vpack.c.b16 %v397, %v395
    %v628 = vpack.c.b16 %v400, %v398
    %v629 = vpack.c.b16 %v401, %v399
    %v630 = vpack.c.b16 %v404, %v402
    %v631 = vpack.c.b16 %v405, %v403
    %v632 = vpack.c.b16 %v408, %v406
    %v633 = vpack.c.b16 %v409, %v407
    %v634 = vpack.c.b16 %v412, %v410
    %v635 = vpack.c.b16 %v413, %v411
    %v636 = vpack.c.b16 %v416, %v414
    %v637 = vpack.c.b16 %v417, %v415
    %v638 = vpack.c.b16 %v420, %v418
    %v639 = vpack.c.b16 %v421, %v419
    %v640 = vpack.c.b16 %v424, %v422
    %v641 = vpack.c.b16 %v425, %v423
    %v642 = vpack.c.b16 %v428, %v426
    %v643 = vpack.c.b16 %v429, %v427
    %v644 = vpack.c.b16 %v432, %v430
    %v645 = vpack.c.b16 %v433, %v431
    %v646 = vpack.c.b16 %v436, %v434
    %v647 = vpack.c.b16 %v437, %v435
    %v648 = vpack.c.b16 %v440, %v438
    %v649 = vpack.c.b16 %v441, %v439
    %v650 = vpack.c.b16 %v444, %v442
    %v651 = vpack.c.b16 %v445, %v443
    %v652 = vpack.c.b16 %v448, %v446
    %v653 = vpack.c.b16 %v449, %v447
    %v654 = vpack.c.b16 %v452, %v450
    %v655 = vpack.c.b16 %v453, %v451
    %v656 = vpack.c.b16 %v456, %v454
    %v657 = vpack.c.b16 %v457, %v455
    %v658 = vpack.c.b16 %v460, %v458
    %v659 = vpack.c.b16 %v461, %v459
    %v660 = vpack.c.b16 %v464, %v462
    %v661 = vpack.c.b16 %v465, %v463
    %v662 = vpack.c.b16 %v468, %v466
    %v663 = vpack.c.b16 %v469, %v467
    %v664 = vpack.c.b16 %v472, %v470
    %v665 = vpack.c.b16 %v473, %v471
    %v666 = vpack.c.b16 %v476, %v474
    %v667 = vpack.c.b16 %v477, %v475
    %v668 = vpack.c.b16 %v480, %v478
    %v669 = vpack.c.b16 %v481, %v479
    %v670 = vpack.c.b16 %v484, %v482
    %v671 = vpack.c.b16 %v485, %v483
    %v672 = vpack.c.b16 %v488, %v486
    %v673 = vpack.c.b16 %v489, %v487
    %v674 = vpack.c.b16 %v492, %v490
    %v675 = vpack.c.b16 %v493, %v491
    %v676 = vpack.c.b16 %v496, %v494
    %v677 = vpack.c.b16 %v497, %v495
    %v678 = vpack.c.b16 %v500, %v498
    %v679 = vpack.c.b16 %v501, %v499
    %v680 = vpack.c.b16 %v504, %v502
    %v681 = vpack.c.b16 %v505, %v503
    %v682 = vpack.c.b16 %v508, %v506
    %v683 = vpack.c.b16 %v509, %v507
    %v684 = vpack.c.b16 %v512, %v510
    %v685 = vpack.c.b16 %v513, %v511
    %v686 = vpack.c.b16 %v516, %v514
    %v687 = vpack.c.b16 %v517, %v515
    %v688 = vpack.c.b16 %v520, %v518
    %v689 = vpack.c.b16 %v521, %v519
    %v690 = vpack.c.b16 %v524, %v522
    %v691 = vpack.c.b16 %v525, %v523
    %v692 = vpack.c.b16 %v528, %v526
    %v693 = vpack.c.b16 %v529, %v527
    %v694 = vpack.c.b16 %v532, %v530
    %v695 = vpack.c.b16 %v533, %v531
    %v696 = vpack.c.b16 %v536, %v534
    %v697 = vpack.c.b16 %v537, %v535
    %v698 = vpack.c.b16 %v540, %v538
    %v699 = vpack.c.b16 %v541, %v539
    %v700 = vpack.c.b16 %v544, %v542
    %v701 = vpack.c.b16 %v545, %v543
    %v702 = vpack.c.b16 %v548, %v546
    %v703 = vpack.c.b16 %v549, %v547
    %v704 = vpack.c.b16 %v552, %v550
    %v705 = vpack.c.b16 %v553, %v551
    %v706 = vpack.c.b16 %v556, %v554
    %v707 = vpack.c.b16 %v557, %v555
    %v708 = vpack.c.b16 %v560, %v558
    %v709 = vpack.c.b16 %v561, %v559
    %v710 = vpack.c.b16 %v564, %v562
    %v711 = vpack.c.b16 %v565, %v563
    %v712 = vpack.c.b16 %v568, %v566
    %v713 = vpack.c.b16 %v569, %v567
    %v714 = vpack.c.b16 %v572, %v570
    %v715 = vpack.c.b16 %v573, %v571
    %v716 = vpack.c.b16 %v576, %v574
    %v717 = vpack.c.b16 %v577, %v575
    %v718 = vpack.c.b16 %v580, %v578
    %v719 = vpack.c.b16 %v581, %v579
    %v720 = vpack.c.b16 %v584, %v582
    %v721 = vpack.c.b16 %v585, %v583
    %v722 = vpack.c.b16 %v588, %v586
    %v723 = vpack.c.b16 %v589, %v587
    %v724 = vpack.c.b16 %v592, %v590
    %v725 = vpack.c.b16 %v593, %v591
    %v726 = vpack.c.b16 %v596, %v594
    %v727 = vpack.c.b16 %v597, %v595
    %v728 = vpack.c.b16 %v600, %v598
    %v729 = vpack.c.b16 %v601, %v599
    %858 = vmatpush.bf16.msra.mxu0 %v616
    %859 = vmatpush.bf16.msra.mxu0 %v614
    %860 = vmatpush.bf16.msra.mxu0 %v612
    %861 = vmatpush.bf16.msra.mxu0 %v610
    %862 = vmatpush.bf16.msra.mxu0 %v608
    %863 = vmatpush.bf16.msra.mxu0 %v606
    %864 = vmatpush.bf16.msra.mxu0 %v604
    %865 = vmatpush.bf16.msra.mxu0 %v602
    %866 = vmatmul.bf16.gmra.mxu0 %v202
    %v867 = vpop.f32.mrf.mxu0
    %v868 = vadd.f32 %v174, %v867
    %v869 = vpop.f32.mrf.mxu0
    %v870 = vadd.f32 %v174, %v869
    %871 = vdwg.mxu0
    %872 = vmatpush.bf16.msra.mxu0 %v632
    %873 = vmatpush.bf16.msra.mxu0 %v630
    %874 = vmatpush.bf16.msra.mxu0 %v628
    %875 = vmatpush.bf16.msra.mxu0 %v626
    %876 = vmatpush.bf16.msra.mxu0 %v624
    %877 = vmatpush.bf16.msra.mxu0 %v622
    %878 = vmatpush.bf16.msra.mxu0 %v620
    %879 = vmatpush.bf16.msra.mxu0 %v618
    %880 = vmatmul.bf16.gmra.mxu0 %v203
    %v881 = vpop.f32.mrf.mxu0
    %v882 = vadd.f32 %v868, %v881
    %v883 = vpop.f32.mrf.mxu0
    %v884 = vadd.f32 %v870, %v883
    %885 = vdwg.mxu0
    %886 = vmatpush.bf16.msra.mxu0 %v648
    %887 = vmatpush.bf16.msra.mxu0 %v646
    %888 = vmatpush.bf16.msra.mxu0 %v644
    %889 = vmatpush.bf16.msra.mxu0 %v642
    %890 = vmatpush.bf16.msra.mxu0 %v640
    %891 = vmatpush.bf16.msra.mxu0 %v638
    %892 = vmatpush.bf16.msra.mxu0 %v636
    %893 = vmatpush.bf16.msra.mxu0 %v634
    %894 = vmatmul.bf16.gmra.mxu0 %v204
    %v895 = vpop.f32.mrf.mxu0
    %v896 = vadd.f32 %v882, %v895
    %v897 = vpop.f32.mrf.mxu0
    %v898 = vadd.f32 %v884, %v897
    %899 = vdwg.mxu0
    %900 = vmatpush.bf16.msra.mxu0 %v664
    %901 = vmatpush.bf16.msra.mxu0 %v662
    %902 = vmatpush.bf16.msra.mxu0 %v660
    %903 = vmatpush.bf16.msra.mxu0 %v658
    %904 = vmatpush.bf16.msra.mxu0 %v656
    %905 = vmatpush.bf16.msra.mxu0 %v654
    %906 = vmatpush.bf16.msra.mxu0 %v652
    %907 = vmatpush.bf16.msra.mxu0 %v650
    %908 = vmatmul.bf16.gmra.mxu0 %v205
    %v909 = vpop.f32.mrf.mxu0
    %v910 = vadd.f32 %v896, %v909
    %v911 = vpop.f32.mrf.mxu0
    %v912 = vadd.f32 %v898, %v911
    %913 = vdwg.mxu0
    %914 = vmatpush.bf16.msra.mxu0 %v680
    %915 = vmatpush.bf16.msra.mxu0 %v678
    %916 = vmatpush.bf16.msra.mxu0 %v676
    %917 = vmatpush.bf16.msra.mxu0 %v674
    %918 = vmatpush.bf16.msra.mxu0 %v672
    %919 = vmatpush.bf16.msra.mxu0 %v670
    %920 = vmatpush.bf16.msra.mxu0 %v668
    %921 = vmatpush.bf16.msra.mxu0 %v666
    %922 = vmatmul.bf16.gmra.mxu0 %v206
    %v923 = vpop.f32.mrf.mxu0
    %v924 = vadd.f32 %v910, %v923
    %v925 = vpop.f32.mrf.mxu0
    %v926 = vadd.f32 %v912, %v925
    %927 = vdwg.mxu0
    %928 = vmatpush.bf16.msra.mxu0 %v696
    %929 = vmatpush.bf16.msra.mxu0 %v694
    %930 = vmatpush.bf16.msra.mxu0 %v692
    %931 = vmatpush.bf16.msra.mxu0 %v690
    %932 = vmatpush.bf16.msra.mxu0 %v688
    %933 = vmatpush.bf16.msra.mxu0 %v686
    %934 = vmatpush.bf16.msra.mxu0 %v684
    %935 = vmatpush.bf16.msra.mxu0 %v682
    %936 = vmatmul.bf16.gmra.mxu0 %v207
    %v937 = vpop.f32.mrf.mxu0
    %v938 = vadd.f32 %v924, %v937
    %v939 = vpop.f32.mrf.mxu0
    %v940 = vadd.f32 %v926, %v939
    %941 = vdwg.mxu0
    %942 = vmatpush.bf16.msra.mxu0 %v712
    %943 = vmatpush.bf16.msra.mxu0 %v710
    %944 = vmatpush.bf16.msra.mxu0 %v708
    %945 = vmatpush.bf16.msra.mxu0 %v706
    %946 = vmatpush.bf16.msra.mxu0 %v704
    %947 = vmatpush.bf16.msra.mxu0 %v702
    %948 = vmatpush.bf16.msra.mxu0 %v700
    %949 = vmatpush.bf16.msra.mxu0 %v698
    %950 = vmatmul.bf16.gmra.mxu0 %v208
    %v951 = vpop.f32.mrf.mxu0
    %v952 = vadd.f32 %v938, %v951
    %v953 = vpop.f32.mrf.mxu0
    %v954 = vadd.f32 %v940, %v953
    %955 = vdwg.mxu0
    %956 = vmatpush.bf16.msra.mxu0 %v728
    %957 = vmatpush.bf16.msra.mxu0 %v726
    %958 = vmatpush.bf16.msra.mxu0 %v724
    %959 = vmatpush.bf16.msra.mxu0 %v722
    %960 = vmatpush.bf16.msra.mxu0 %v720
    %961 = vmatpush.bf16.msra.mxu0 %v718
    %962 = vmatpush.bf16.msra.mxu0 %v716
    %963 = vmatpush.bf16.msra.mxu0 %v714
    %964 = vmatmul.bf16.gmra.mxu0 %v209
    %v965 = vpop.f32.mrf.mxu0
    %v966 = vadd.f32 %v952, %v965
    %v967 = vpop.f32.mrf.mxu0
    %v968 = vadd.f32 %v954, %v967
    %969 = vdwg.mxu0
    %970 = vmatpush.bf16.msra.mxu0 %v617
    %971 = vmatpush.bf16.msra.mxu0 %v615
    %972 = vmatpush.bf16.msra.mxu0 %v613
    %973 = vmatpush.bf16.msra.mxu0 %v611
    %974 = vmatpush.bf16.msra.mxu0 %v609
    %975 = vmatpush.bf16.msra.mxu0 %v607
    %976 = vmatpush.bf16.msra.mxu0 %v605
    %977 = vmatpush.bf16.msra.mxu0 %v603
    %978 = vmatmul.bf16.gmra.mxu0 %v202
    %v979 = vpop.f32.mrf.mxu0
    %v980 = vadd.f32 %v175, %v979
    %v981 = vpop.f32.mrf.mxu0
    %v982 = vadd.f32 %v175, %v981
    %983 = vdwg.mxu0
    %984 = vmatpush.bf16.msra.mxu0 %v633
    %985 = vmatpush.bf16.msra.mxu0 %v631
    %986 = vmatpush.bf16.msra.mxu0 %v629
    %987 = vmatpush.bf16.msra.mxu0 %v627
    %988 = vmatpush.bf16.msra.mxu0 %v625
    %989 = vmatpush.bf16.msra.mxu0 %v623
    %990 = vmatpush.bf16.msra.mxu0 %v621
    %991 = vmatpush.bf16.msra.mxu0 %v619
    %992 = vmatmul.bf16.gmra.mxu0 %v203
    %v993 = vpop.f32.mrf.mxu0
    %v994 = vadd.f32 %v980, %v993
    %v995 = vpop.f32.mrf.mxu0
    %v996 = vadd.f32 %v982, %v995
    %997 = vdwg.mxu0
    %998 = vmatpush.bf16.msra.mxu0 %v649
    %999 = vmatpush.bf16.msra.mxu0 %v647
    %1000 = vmatpush.bf16.msra.mxu0 %v645
    %1001 = vmatpush.bf16.msra.mxu0 %v643
    %1002 = vmatpush.bf16.msra.mxu0 %v641
    %1003 = vmatpush.bf16.msra.mxu0 %v639
    %1004 = vmatpush.bf16.msra.mxu0 %v637
    %1005 = vmatpush.bf16.msra.mxu0 %v635
    %1006 = vmatmul.bf16.gmra.mxu0 %v204
    %v1007 = vpop.f32.mrf.mxu0
    %v1008 = vadd.f32 %v994, %v1007
    %v1009 = vpop.f32.mrf.mxu0
    %v1010 = vadd.f32 %v996, %v1009
    %1011 = vdwg.mxu0
    %1012 = vmatpush.bf16.msra.mxu0 %v665
    %1013 = vmatpush.bf16.msra.mxu0 %v663
    %1014 = vmatpush.bf16.msra.mxu0 %v661
    %1015 = vmatpush.bf16.msra.mxu0 %v659
    %1016 = vmatpush.bf16.msra.mxu0 %v657
    %1017 = vmatpush.bf16.msra.mxu0 %v655
    %1018 = vmatpush.bf16.msra.mxu0 %v653
    %1019 = vmatpush.bf16.msra.mxu0 %v651
    %1020 = vmatmul.bf16.gmra.mxu0 %v205
    %v1021 = vpop.f32.mrf.mxu0
    %v1022 = vadd.f32 %v1008, %v1021
    %v1023 = vpop.f32.mrf.mxu0
    %v1024 = vadd.f32 %v1010, %v1023
    %1025 = vdwg.mxu0
    %1026 = vmatpush.bf16.msra.mxu0 %v681
    %1027 = vmatpush.bf16.msra.mxu0 %v679
    %1028 = vmatpush.bf16.msra.mxu0 %v677
    %1029 = vmatpush.bf16.msra.mxu0 %v675
    %1030 = vmatpush.bf16.msra.mxu0 %v673
    %1031 = vmatpush.bf16.msra.mxu0 %v671
    %1032 = vmatpush.bf16.msra.mxu0 %v669
    %1033 = vmatpush.bf16.msra.mxu0 %v667
    %1034 = vmatmul.bf16.gmra.mxu0 %v206
    %v1035 = vpop.f32.mrf.mxu0
    %v1036 = vadd.f32 %v1022, %v1035
    %v1037 = vpop.f32.mrf.mxu0
    %v1038 = vadd.f32 %v1024, %v1037
    %1039 = vdwg.mxu0
    %1040 = vmatpush.bf16.msra.mxu0 %v697
    %1041 = vmatpush.bf16.msra.mxu0 %v695
    %1042 = vmatpush.bf16.msra.mxu0 %v693
    %1043 = vmatpush.bf16.msra.mxu0 %v691
    %1044 = vmatpush.bf16.msra.mxu0 %v689
    %1045 = vmatpush.bf16.msra.mxu0 %v687
    %1046 = vmatpush.bf16.msra.mxu0 %v685
    %1047 = vmatpush.bf16.msra.mxu0 %v683
    %1048 = vmatmul.bf16.gmra.mxu0 %v207
    %v1049 = vpop.f32.mrf.mxu0
    %v1050 = vadd.f32 %v1036, %v1049
    %v1051 = vpop.f32.mrf.mxu0
    %v1052 = vadd.f32 %v1038, %v1051
    %1053 = vdwg.mxu0
    %1054 = vmatpush.bf16.msra.mxu0 %v713
    %1055 = vmatpush.bf16.msra.mxu0 %v711
    %1056 = vmatpush.bf16.msra.mxu0 %v709
    %1057 = vmatpush.bf16.msra.mxu0 %v707
    %1058 = vmatpush.bf16.msra.mxu0 %v705
    %1059 = vmatpush.bf16.msra.mxu0 %v703
    %1060 = vmatpush.bf16.msra.mxu0 %v701
    %1061 = vmatpush.bf16.msra.mxu0 %v699
    %1062 = vmatmul.bf16.gmra.mxu0 %v208
    %v1063 = vpop.f32.mrf.mxu0
    %v1064 = vadd.f32 %v1050, %v1063
    %v1065 = vpop.f32.mrf.mxu0
    %v1066 = vadd.f32 %v1052, %v1065
    %1067 = vdwg.mxu0
    %1068 = vmatpush.bf16.msra.mxu0 %v729
    %1069 = vmatpush.bf16.msra.mxu0 %v727
    %1070 = vmatpush.bf16.msra.mxu0 %v725
    %1071 = vmatpush.bf16.msra.mxu0 %v723
    %1072 = vmatpush.bf16.msra.mxu0 %v721
    %1073 = vmatpush.bf16.msra.mxu0 %v719
    %1074 = vmatpush.bf16.msra.mxu0 %v717
    %1075 = vmatpush.bf16.msra.mxu0 %v715
    %1076 = vmatmul.bf16.gmra.mxu0 %v209
    %v1077 = vpop.f32.mrf.mxu0
    %v1078 = vadd.f32 %v1064, %v1077
    %v1079 = vpop.f32.mrf.mxu0
    %v1080 = vadd.f32 %v1066, %v1079
    %1081 = vdwg.mxu0
    %v1082 = vmax.f32 %v966, 0.0
    %v1083 = vmax.f32 %v1078, 0.0
    %v1084 = vmax.f32 %v968, 0.0
    %v1085 = vmax.f32 %v1080, 0.0
    %v1086 = vpack.c.bf16 %v1084, %v1082
    %v1087 = vpack.c.bf16 %v1085, %v1083
    %v1088 = vld [vmem:[%s3] sm:$0xf]
    %v1089 = vld [vmem:[%s3 + $0x4] sm:$0xf]
    %v1090 = vld [vmem:[%s3 + $0x8] sm:$0xf]
    %v1091 = vld [vmem:[%s3 + $0xc] sm:$0xf]
    %v1092 = vld [vmem:[%s3 + $0x10] sm:$0xf]
    %v1093 = vld [vmem:[%s3 + $0x14] sm:$0xf]
    %v1094 = vld [vmem:[%s3 + $0x18] sm:$0xf]
    %v1095 = vld [vmem:[%s3 + $0x1c] sm:$0xf]
    %v1096 = vld [vmem:[%s3 + $0x20] sm:$0xf]
    %v1097 = vld [vmem:[%s3 + $0x24] sm:$0xf]
    %v1098 = vld [vmem:[%s3 + $0x28] sm:$0xf]
    %v1099 = vld [vmem:[%s3 + $0x2c] sm:$0xf]
    %v1100 = vld [vmem:[%s3 + $0x30] sm:$0xf]
    %v1101 = vld [vmem:[%s3 + $0x34] sm:$0xf]
    %v1102 = vld [vmem:[%s3 + $0x38] sm:$0xf]
    %v1103 = vld [vmem:[%s3 + $0x3c] sm:$0xf]
    %v1104 = vld [vmem:[%s3 + $0x40] sm:$0xf]
    %v1105 = vld [vmem:[%s3 + $0x44] sm:$0xf]
    %v1106 = vld [vmem:[%s3 + $0x48] sm:$0xf]
    %v1107 = vld [vmem:[%s3 + $0x4c] sm:$0xf]
    %v1108 = vld [vmem:[%s3 + $0x50] sm:$0xf]
    %v1109 = vld [vmem:[%s3 + $0x54] sm:$0xf]
    %v1110 = vld [vmem:[%s3 + $0x58] sm:$0xf]
    %v1111 = vld [vmem:[%s3 + $0x5c] sm:$0xf]
    %v1112 = vld [vmem:[%s3 + $0x60] sm:$0xf]
    %v1113 = vld [vmem:[%s3 + $0x64] sm:$0xf]
    %v1114 = vld [vmem:[%s3 + $0x68] sm:$0xf]
    %v1115 = vld [vmem:[%s3 + $0x6c] sm:$0xf]
    %v1116 = vld [vmem:[%s3 + $0x70] sm:$0xf]
    %v1117 = vld [vmem:[%s3 + $0x74] sm:$0xf]
    %v1118 = vld [vmem:[%s3 + $0x78] sm:$0xf]
    %v1119 = vld [vmem:[%s3 + $0x7c] sm:$0xf]
    %v1120 = vld [vmem:[%s4] sm:$0x1]
    %v1122 = vperm.slane %v1120, 0
    %v1156 = vunpack.c.l.b16 %v1088
    %v1157 = vunpack.c.l.b16 %v1089
    %v1158 = vunpack.c.l.b16 %v1090
    %v1159 = vunpack.c.l.b16 %v1091
    %v1160 = vunpack.c.l.b16 %v1092
    %v1161 = vunpack.c.l.b16 %v1093
    %v1162 = vunpack.c.l.b16 %v1094
    %v1163 = vunpack.c.l.b16 %v1095
    %v1164 = vunpack.c.l.b16 %v1096
    %v1165 = vunpack.c.l.b16 %v1097
    %v1166 = vunpack.c.l.b16 %v1098
    %v1167 = vunpack.c.l.b16 %v1099
    %v1168 = vunpack.c.l.b16 %v1100
    %v1169 = vunpack.c.l.b16 %v1101
    %v1170 = vunpack.c.l.b16 %v1102
    %v1171 = vunpack.c.l.b16 %v1103
    %v1172 = vunpack.c.l.b16 %v1104
    %v1173 = vunpack.c.l.b16 %v1105
    %v1174 = vunpack.c.l.b16 %v1106
    %v1175 = vunpack.c.l.b16 %v1107
    %v1176 = vunpack.c.l.b16 %v1108
    %v1177 = vunpack.c.l.b16 %v1109
    %v1178 = vunpack.c.l.b16 %v1110
    %v1179 = vunpack.c.l.b16 %v1111
    %v1180 = vunpack.c.l.b16 %v1112
    %v1181 = vunpack.c.l.b16 %v1113
    %v1182 = vunpack.c.l.b16 %v1114
    %v1183 = vunpack.c.l.b16 %v1115
    %v1184 = vunpack.c.l.b16 %v1116
    %v1185 = vunpack.c.l.b16 %v1117
    %v1186 = vunpack.c.l.b16 %v1118
    %v1187 = vunpack.c.l.b16 %v1119
    %v1188 = vpack.c.b16 %v1157, %v1156
    %v1189 = vpack.c.b16 %v1159, %v1158
    %v1190 = vpack.c.b16 %v1161, %v1160
    %v1191 = vpack.c.b16 %v1163, %v1162
    %v1192 = vpack.c.b16 %v1165, %v1164
    %v1193 = vpack.c.b16 %v1167, %v1166
    %v1194 = vpack.c.b16 %v1169, %v1168
    %v1195 = vpack.c.b16 %v1171, %v1170
    %v1196 = vpack.c.b16 %v1173, %v1172
    %v1197 = vpack.c.b16 %v1175, %v1174
    %v1198 = vpack.c.b16 %v1177, %v1176
    %v1199 = vpack.c.b16 %v1179, %v1178
    %v1200 = vpack.c.b16 %v1181, %v1180
    %v1201 = vpack.c.b16 %v1183, %v1182
    %v1202 = vpack.c.b16 %v1185, %v1184
    %v1203 = vpack.c.b16 %v1187, %v1186
    %1220 = vmatpush.bf16.msra.mxu0 %v1195
    %1221 = vmatpush.bf16.msra.mxu0 %v1194
    %1222 = vmatpush.bf16.msra.mxu0 %v1193
    %1223 = vmatpush.bf16.msra.mxu0 %v1192
    %1224 = vmatpush.bf16.msra.mxu0 %v1191
    %1225 = vmatpush.bf16.msra.mxu0 %v1190
    %1226 = vmatpush.bf16.msra.mxu0 %v1189
    %1227 = vmatpush.bf16.msra.mxu0 %v1188
    %1228 = vmatmul.bf16.gmra.mxu0 %v1086
    %v1229 = vpop.f32.mrf.mxu0
    %v1230 = vadd.f32 %v1122, %v1229
    %v1231 = vpop.f32.mrf.mxu0
    %v1232 = vadd.f32 %v1122, %v1231
    %1233 = vdwg.mxu0
    %1234 = vmatpush.bf16.msra.mxu0 %v1203
    %1235 = vmatpush.bf16.msra.mxu0 %v1202
    %1236 = vmatpush.bf16.msra.mxu0 %v1201
    %1237 = vmatpush.bf16.msra.mxu0 %v1200
    %1238 = vmatpush.bf16.msra.mxu0 %v1199
    %1239 = vmatpush.bf16.msra.mxu0 %v1198
    %1240 = vmatpush.bf16.msra.mxu0 %v1197
    %1241 = vmatpush.bf16.msra.mxu0 %v1196
    %1242 = vmatmul.bf16.gmra.mxu0 %v1087
    %v1243 = vpop.f32.mrf.mxu0
    %v1244 = vadd.f32 %v1230, %v1243
    %v1245 = vpop.f32.mrf.mxu0
    %v1246 = vadd.f32 %v1232, %v1245
    %1247 = vdwg.mxu0
    %v1248 = vmul.f32 %v1244, %v1244
    %v1249 = vmul.f32 %v1246, %v1246
    %1250 = vadd.xlane.f32.xlu0 %v1248
    %v1251 = vpop.xlane.xlu0 %1250
    %1252 = vadd.xlane.f32.xlu0 %v1249
    %v1253 = vpop.xlane.xlu0 %1252
    %v1254 = vadd.f32 %v1251, 1e-12
    %v1255 = vadd.f32 %v1253, 1e-12
    %v1256 = vrsqrt.pop %v1254
    %v1257 = vmul.f32 %v1256, %v1254
    %v1258 = vmul.f32 %v1257, %v1256
    %v1259 = vmul.f32 0.5, %v1258
    %v1260 = vsub.f32 1.5, %v1259
    %v1261 = vmul.f32 %v1256, %v1260
    %vm1262 = vweird.f32 %v1254
    %vm1263 = vweird.f32 %v1256
    %vm1264 = vmor %vm1262, %vm1263
    %v1265 = vsel %vm1264, %v1256, %v1261
    %v1266 = vrsqrt.pop %v1255
    %v1267 = vmul.f32 %v1266, %v1255
    %v1268 = vmul.f32 %v1267, %v1266
    %v1269 = vmul.f32 0.5, %v1268
    %v1270 = vsub.f32 1.5, %v1269
    %v1271 = vmul.f32 %v1266, %v1270
    %vm1272 = vweird.f32 %v1255
    %vm1273 = vweird.f32 %v1266
    %vm1274 = vmor %vm1272, %vm1273
    %v1275 = vsel %vm1274, %v1266, %v1271
    %v1276 = vmul.f32 %v1244, %v1265
    %v1277 = vmul.f32 %v1246, %v1275
    %1278 = vst [vmem:[%s5] sm:$0xff] %v1276
    %1279 = vst [vmem:[%s5 + $0x8] sm:$0xff] %v1277
    // Predicated region
    $region26: #{_get_features_pair.1} parent=1 // pred_check
      _
    $region27: #{_get_features_pair.1} parent=1 // pred_check_branch
      %1281 = sbr.rel (0) target = $region29
    $region28: #{_get_features_pair.1} parent=1 // pred_region
      _
    $region29: #{_get_features_pair.1} parent=1 // pred_fallthru
      _
    // Predicated region
    $region30: #{_get_features_pair.1} parent=1 // pred_check
      _
    $region31: #{_get_features_pair.1} parent=1 // pred_check_branch
      %1283 = sbr.rel (0) target = $region33
    $region32: #{_get_features_pair.1} parent=1 // pred_region
      _
    $region33: #{_get_features_pair.1} parent=1 // pred_fallthru
      _
    %1284 = vsyncpa [#allocation3], 1

</llo_original>
